<compile_context>
chip_gen: v6e
topology: v6e:2x2x1
jax: 0.10.0
libtpu: 0.0.40
codegen_flags: <defaults>
</compile_context>

<pallas_src>
import functools

import jax
import jax.numpy as jnp
import numpy as np
from jax import lax
from jax.experimental import pallas as pl
from jax.experimental.pallas import tpu as pltpu


def _warp_kernel(img_ref, flow_ref, base_ref, out_ref, *, height, width, num_channel):
    """Bilinear warp of one output-pixel tile of one batch element.

    img_ref : (1, C*W, H) float  img[c*W + x, y] = input[c, y, x]  (full image, this batch)
    flow_ref: (1, 2, T)   float  flow[0] = dx, flow[1] = dy for the T output pixels
    base_ref: (2, T)      float  base_x, base_y (mesh grid) of the T output pixels
    out_ref : (1, C, T)   output, pixel index on lanes (lane-dense stores)
    """
    f32 = jnp.float32

    # Sampling coordinates (clamped exactly like the PyTorch reference).
    coords = base_ref[...].astype(f32) + flow_ref[0].astype(f32)      # (2, T)
    x = jnp.clip(coords[0:1, :], 0.0, float(width - 1))               # (1, T) sublane slice
    y = jnp.clip(coords[1:2, :], 0.0, float(height - 1))              # (1, T)

    x0f = jnp.floor(x)
    y0f = jnp.floor(y)
    x1f = x0f + 1.0
    y1f = y0f + 1.0

    x0 = x0f.astype(jnp.int32)
    y0 = y0f.astype(jnp.int32)
    x1 = jnp.clip(x1f, 0.0, float(width - 1)).astype(jnp.int32)
    y1 = jnp.clip(y1f, 0.0, float(height - 1)).astype(jnp.int32)

    wx0 = x1f - x                                                     # (1, T)
    wx1 = x - x0f
    wy0 = y1f - y
    wy1 = y - y0f

    t = x.shape[-1]

    # Vertical one-hot interpolation matrix, (H, T).  When y0 == y1 (clamped border)
    # the two terms add, matching the reference's separate gathers.
    ys_iota = lax.broadcasted_iota(jnp.int32, (height, t), 0)
    w_row = (jnp.where(ys_iota == y0, wy0, 0.0)
             + jnp.where(ys_iota == y1, wy1, 0.0))                    # (H, T)

    # Horizontal one-hot interpolation matrix, (W, T).
    xs_iota = lax.broadcasted_iota(jnp.int32, (width, t), 0)
    w_col = (jnp.where(xs_iota == x0, wx0, 0.0)
             + jnp.where(xs_iota == x1, wx1, 0.0))                    # (W, T)

    # Vertical gather + interpolation on the MXU: (C*W, H) @ (H, T) -> (C*W, T)
    # v[c*W + xs, p] = vertically interpolated value of channel c, column xs for pixel p.
    v = jnp.dot(img_ref[0].astype(f32), w_row, preferred_element_type=f32)

    # Horizontal interpolation: per channel, weight the W columns and reduce.
    rows = []
    for c in range(num_channel):
        vc = v[c * width:(c + 1) * width, :]                          # (W, T) static slice
        rows.append(jnp.sum(vc * w_col, axis=0, keepdims=True))       # (1, T)
    out = jnp.concatenate(rows, axis=0)                               # (C, T)
    out_ref[0] = out.astype(out_ref.dtype)


def _pick_tile(hw):
    """Output-pixel tile size: lane-aligned (multiple of 128) divisor of HW."""
    for t in (256, 512, 128, 1024):
        if hw % t == 0:
            return t
    return hw  # tiny / odd sizes: single tile equal to the full extent


def backward_warp(inp, flow):
    """JAX/Pallas equivalent of Backward_warp.forward(input, flow).

    inp : (B, C, H, W) float32
    flow: (B, 2, H, W) float32   (flow[:,0] = dx, flow[:,1] = dy)
    returns (B, C, H, W) float32
    """
    B, C, H, W = inp.shape
    HW = H * W
    T = _pick_tile(HW)
    n_tiles = HW // T

    # (B, C, H, W) -> (B, C*W, H) so the vertical stage is a plain matmul (no in-kernel
    # transpose):  img_k[b, c*W + x, y] = inp[b, c, y, x]
    img_k = jnp.transpose(inp, (0, 1, 3, 2)).reshape(B, C * W, H)
    flow_k = flow.reshape(B, 2, HW).astype(jnp.float32)

    # Host-precomputed mesh grid (row-major pixel p = y*W + x), pixel index on lanes.
    xs = jnp.arange(W, dtype=jnp.float32)
    ys = jnp.arange(H, dtype=jnp.float32)
    base = jnp.stack([jnp.tile(xs, H), jnp.repeat(ys, W)], axis=0)    # (2, HW)

    kernel = functools.partial(_warp_kernel, height=H, width=W, num_channel=C)

    # VMEM budget: double-buffered I/O blocks + in-kernel temporaries + headroom.
    itemsize = 4
    img_block = C * W * H * itemsize
    io_block = (2 * T + 2 * T + C * T) * itemsize
    scratch = (H * T + W * T + C * W * T + 32 * T) * itemsize
    vmem_limit = 2 * (img_block + io_block) + 2 * scratch + (8 << 20)
    vmem_limit = int(min(max(vmem_limit, 32 << 20), 100 << 20))

    out = pl.pallas_call(
        kernel,
        out_shape=jax.ShapeDtypeStruct((B, C, HW), inp.dtype),
        grid_spec=pltpu.PrefetchScalarGridSpec(
            num_scalar_prefetch=0,
            grid=(B, n_tiles),
            in_specs=[
                pl.BlockSpec((1, C * W, H), lambda b, t: (b, 0, 0)),  # full image / batch
                pl.BlockSpec((1, 2, T), lambda b, t: (b, 0, t)),      # flow tile
                pl.BlockSpec((2, T), lambda b, t: (0, t)),            # base grid tile
            ],
            out_specs=pl.BlockSpec((1, C, T), lambda b, t: (b, 0, t)),
        ),
        compiler_params=pltpu.CompilerParams(
            dimension_semantics=("parallel", "parallel"),
            vmem_limit_bytes=vmem_limit),
    )(img_k, flow_k, base)

    return out.reshape(B, C, H, W)


def backward_warp_ref(inp, flow):
    """Pure-JAX reference (mirrors the PyTorch semantics) for validation."""
    B, C, H, W = inp.shape
    img = jnp.transpose(inp, (0, 2, 3, 1))                 # (B, H, W, C)
    xs = jnp.arange(W, dtype=jnp.float32)[None, None, :]
    ys = jnp.arange(H, dtype=jnp.float32)[None, :, None]
    x = jnp.clip(xs + flow[:, 0], 0.0, W - 1)
    y = jnp.clip(ys + flow[:, 1], 0.0, H - 1)
    x0f = jnp.floor(x); y0f = jnp.floor(y)
    x1f = x0f + 1.0;    y1f = y0f + 1.0
    x0 = x0f.astype(jnp.int32); y0 = y0f.astype(jnp.int32)
    x1 = jnp.clip(x1f, 0, W - 1).astype(jnp.int32)
    y1 = jnp.clip(y1f, 0, H - 1).astype(jnp.int32)
    bidx = jnp.arange(B)[:, None, None]

    def gather(yy, xx):
        return img[bidx, yy, xx]                           # (B, H, W, C)

    Ia, Ib, Ic, Id = gather(y0, x0), gather(y1, x0), gather(y0, x1), gather(y1, x1)
    wa = ((x1f - x) * (y1f - y))[..., None]
    wb = ((x1f - x) * (y - y0f))[..., None]
    wc = ((x - x0f) * (y1f - y))[..., None]
    wd = ((x - x0f) * (y - y0f))[..., None]
    out = wa * Ia + wb * Ib + wc * Ic + wd * Id
    return jnp.transpose(out, (0, 3, 1, 2))


if __name__ == "__main__":
    key = jax.random.PRNGKey(0)
    k1, k2 = jax.random.split(key)

    B, C, H, W = 2, 4, 16, 32          # HW = 512 -> T = 256 -> grid (2, 2): exercises tiling
    inp = jax.random.normal(k1, (B, C, H, W), dtype=jnp.float32)
    flow = 3.0 * jax.random.normal(k2, (B, 2, H, W), dtype=jnp.float32)

    out = jax.block_until_ready(backward_warp(inp, flow))
    ref = jax.block_until_ready(backward_warp_ref(inp, flow))
    np.testing.assert_allclose(np.asarray(out), np.asarray(ref), rtol=1e-5, atol=1e-5)

    print("KERNEL_OK")
</pallas_src>

<mosaic_0001>
module attributes {stable_mosaic.version = 11 : i64} {
  func.func @_warp_kernel(%arg0: i32, %arg1: i32, %arg2: memref<1x128x16xf32, #tpu.memory_space<vmem>>, %arg3: memref<1x2x256xf32, #tpu.memory_space<vmem>>, %arg4: memref<2x256xf32, #tpu.memory_space<vmem>>, %arg5: memref<1x4x256xf32, #tpu.memory_space<vmem>>) attributes {dimension_semantics = [#tpu.dimension_semantics<parallel>, #tpu.dimension_semantics<parallel>], iteration_bounds = array<i64: 2, 2>, scalar_prefetch = 0 : i64, scratch_operands = 0 : i64, tpu.core_type = #tpu.core_type<tc>, window_params = [{transform_indices = @transform_0, window_bounds = array<i64: 1, 128, 16>}, {transform_indices = @transform_1, window_bounds = array<i64: 1, 2, 256>}, {transform_indices = @transform_2, window_bounds = array<i64: 2, 256>}, {transform_indices = @transform_3, window_bounds = array<i64: 1, 4, 256>}]} {
    %c0 = arith.constant 0 : index
    %c0_0 = arith.constant 0 : index
    %0 = vector.load %arg4[%c0, %c0_0] : memref<2x256xf32, #tpu.memory_space<vmem>>, vector<2x256xf32>
    %c0_1 = arith.constant 0 : index
    %c0_2 = arith.constant 0 : index
    %c0_3 = arith.constant 0 : index
    %1 = vector.load %arg3[%c0_1, %c0_2, %c0_3] : memref<1x2x256xf32, #tpu.memory_space<vmem>>, vector<1x2x256xf32>
    %2 = vector.shape_cast %1 : vector<1x2x256xf32> to vector<2x256xf32>
    %3 = arith.addf %0, %2 : vector<2x256xf32>
    %4 = vector.extract_strided_slice %3 {offsets = [0, 0], sizes = [1, 256], strides = [1, 1]} : vector<2x256xf32> to vector<1x256xf32>
    %cst = arith.constant 0.000000e+00 : f32
    %cst_4 = arith.constant 3.100000e+01 : f32
    %5 = vector.broadcast %cst : f32 to vector<1x256xf32>
    %6 = arith.maximumf %5, %4 : vector<1x256xf32>
    %7 = vector.broadcast %cst_4 : f32 to vector<1x256xf32>
    %8 = arith.minimumf %7, %6 : vector<1x256xf32>
    %9 = vector.extract_strided_slice %3 {offsets = [1, 0], sizes = [1, 256], strides = [1, 1]} : vector<2x256xf32> to vector<1x256xf32>
    %cst_5 = arith.constant 0.000000e+00 : f32
    %cst_6 = arith.constant 1.500000e+01 : f32
    %10 = vector.broadcast %cst_5 : f32 to vector<1x256xf32>
    %11 = arith.maximumf %10, %9 : vector<1x256xf32>
    %12 = vector.broadcast %cst_6 : f32 to vector<1x256xf32>
    %13 = arith.minimumf %12, %11 : vector<1x256xf32>
    %14 = math.floor %8 : vector<1x256xf32>
    %15 = math.floor %13 : vector<1x256xf32>
    %cst_7 = arith.constant 1.000000e+00 : f32
    %16 = vector.broadcast %cst_7 : f32 to vector<1x256xf32>
    %17 = arith.addf %14, %16 : vector<1x256xf32>
    %cst_8 = arith.constant 1.000000e+00 : f32
    %18 = vector.broadcast %cst_8 : f32 to vector<1x256xf32>
    %19 = arith.addf %15, %18 : vector<1x256xf32>
    %20 = arith.fptosi %14 : vector<1x256xf32> to vector<1x256xi32>
    %21 = arith.fptosi %15 : vector<1x256xf32> to vector<1x256xi32>
    %cst_9 = arith.constant 0.000000e+00 : f32
    %cst_10 = arith.constant 3.100000e+01 : f32
    %22 = vector.broadcast %cst_9 : f32 to vector<1x256xf32>
    %23 = arith.maximumf %22, %17 : vector<1x256xf32>
    %24 = vector.broadcast %cst_10 : f32 to vector<1x256xf32>
    %25 = arith.minimumf %24, %23 : vector<1x256xf32>
    %26 = arith.fptosi %25 : vector<1x256xf32> to vector<1x256xi32>
    %cst_11 = arith.constant 0.000000e+00 : f32
    %cst_12 = arith.constant 1.500000e+01 : f32
    %27 = vector.broadcast %cst_11 : f32 to vector<1x256xf32>
    %28 = arith.maximumf %27, %19 : vector<1x256xf32>
    %29 = vector.broadcast %cst_12 : f32 to vector<1x256xf32>
    %30 = arith.minimumf %29, %28 : vector<1x256xf32>
    %31 = arith.fptosi %30 : vector<1x256xf32> to vector<1x256xi32>
    %32 = arith.subf %17, %8 : vector<1x256xf32>
    %33 = arith.subf %8, %14 : vector<1x256xf32>
    %34 = arith.subf %19, %13 : vector<1x256xf32>
    %35 = arith.subf %13, %15 : vector<1x256xf32>
    %36 = tpu.iota {dimensions = array<i32: 0>} : vector<16x256xi32>
    %37 = vector.broadcast %21 : vector<1x256xi32> to vector<16x256xi32>
    %38 = arith.cmpi eq, %36, %37 : vector<16x256xi32>
    %cst_13 = arith.constant 0.000000e+00 : f32
    %39 = vector.shape_cast %34 : vector<1x256xf32> to vector<1x256xf32>
    %40 = vector.broadcast %39 : vector<1x256xf32> to vector<16x256xf32>
    %41 = vector.broadcast %cst_13 : f32 to vector<16x256xf32>
    %42 = arith.select %38, %40, %41 : vector<16x256xi1>, vector<16x256xf32>
    %43 = vector.broadcast %31 : vector<1x256xi32> to vector<16x256xi32>
    %44 = arith.cmpi eq, %36, %43 : vector<16x256xi32>
    %cst_14 = arith.constant 0.000000e+00 : f32
    %45 = vector.shape_cast %35 : vector<1x256xf32> to vector<1x256xf32>
    %46 = vector.broadcast %45 : vector<1x256xf32> to vector<16x256xf32>
    %47 = vector.broadcast %cst_14 : f32 to vector<16x256xf32>
    %48 = arith.select %44, %46, %47 : vector<16x256xi1>, vector<16x256xf32>
    %49 = arith.addf %42, %48 : vector<16x256xf32>
    %50 = tpu.iota {dimensions = array<i32: 0>} : vector<32x256xi32>
    %51 = vector.broadcast %20 : vector<1x256xi32> to vector<32x256xi32>
    %52 = arith.cmpi eq, %50, %51 : vector<32x256xi32>
    %cst_15 = arith.constant 0.000000e+00 : f32
    %53 = vector.shape_cast %32 : vector<1x256xf32> to vector<1x256xf32>
    %54 = vector.broadcast %53 : vector<1x256xf32> to vector<32x256xf32>
    %55 = vector.broadcast %cst_15 : f32 to vector<32x256xf32>
    %56 = arith.select %52, %54, %55 : vector<32x256xi1>, vector<32x256xf32>
    %57 = vector.broadcast %26 : vector<1x256xi32> to vector<32x256xi32>
    %58 = arith.cmpi eq, %50, %57 : vector<32x256xi32>
    %cst_16 = arith.constant 0.000000e+00 : f32
    %59 = vector.shape_cast %33 : vector<1x256xf32> to vector<1x256xf32>
    %60 = vector.broadcast %59 : vector<1x256xf32> to vector<32x256xf32>
    %61 = vector.broadcast %cst_16 : f32 to vector<32x256xf32>
    %62 = arith.select %58, %60, %61 : vector<32x256xi1>, vector<32x256xf32>
    %63 = arith.addf %56, %62 : vector<32x256xf32>
    %c0_17 = arith.constant 0 : index
    %c0_18 = arith.constant 0 : index
    %c0_19 = arith.constant 0 : index
    %64 = vector.load %arg2[%c0_17, %c0_18, %c0_19] : memref<1x128x16xf32, #tpu.memory_space<vmem>>, vector<1x128x16xf32>
    %65 = vector.shape_cast %64 : vector<1x128x16xf32> to vector<128x16xf32>
    %cst_20 = arith.constant dense<0.000000e+00> : vector<128x256xf32>
    %66 = tpu.matmul %65, %49, %cst_20 {dimension_numbers = #tpu.dot_dimension_numbers<[1], [0], [0], [1], [0, 0, 1, 1], [], []>} : vector<128x16xf32>, vector<16x256xf32>, vector<128x256xf32> -> vector<128x256xf32>
    %67 = vector.extract_strided_slice %66 {offsets = [0, 0], sizes = [32, 256], strides = [1, 1]} : vector<128x256xf32> to vector<32x256xf32>
    %68 = arith.mulf %67, %63 : vector<32x256xf32>
    %cst_21 = arith.constant dense<0.000000e+00> : vector<256xf32>
    %69 = vector.multi_reduction <add>, %68, %cst_21 [0] : vector<32x256xf32> to vector<256xf32>
    %70 = vector.shape_cast %69 : vector<256xf32> to vector<1x256xf32>
    %71 = vector.extract_strided_slice %66 {offsets = [32, 0], sizes = [32, 256], strides = [1, 1]} : vector<128x256xf32> to vector<32x256xf32>
    %72 = arith.mulf %71, %63 : vector<32x256xf32>
    %cst_22 = arith.constant dense<0.000000e+00> : vector<256xf32>
    %73 = vector.multi_reduction <add>, %72, %cst_22 [0] : vector<32x256xf32> to vector<256xf32>
    %74 = vector.shape_cast %73 : vector<256xf32> to vector<1x256xf32>
    %75 = vector.extract_strided_slice %66 {offsets = [64, 0], sizes = [32, 256], strides = [1, 1]} : vector<128x256xf32> to vector<32x256xf32>
    %76 = arith.mulf %75, %63 : vector<32x256xf32>
    %cst_23 = arith.constant dense<0.000000e+00> : vector<256xf32>
    %77 = vector.multi_reduction <add>, %76, %cst_23 [0] : vector<32x256xf32> to vector<256xf32>
    %78 = vector.shape_cast %77 : vector<256xf32> to vector<1x256xf32>
    %79 = vector.extract_strided_slice %66 {offsets = [96, 0], sizes = [32, 256], strides = [1, 1]} : vector<128x256xf32> to vector<32x256xf32>
    %80 = arith.mulf %79, %63 : vector<32x256xf32>
    %cst_24 = arith.constant dense<0.000000e+00> : vector<256xf32>
    %81 = vector.multi_reduction <add>, %80, %cst_24 [0] : vector<32x256xf32> to vector<256xf32>
    %82 = vector.shape_cast %81 : vector<256xf32> to vector<1x256xf32>
    %83 = tpu.concatenate %70, %74, %78, %82 in 0 : vector<1x256xf32>, vector<1x256xf32>, vector<1x256xf32>, vector<1x256xf32> -> vector<4x256xf32>
    %c0_25 = arith.constant 0 : index
    %c0_26 = arith.constant 0 : index
    %c0_27 = arith.constant 0 : index
    %84 = vector.load %arg5[%c0_25, %c0_26, %c0_27] : memref<1x4x256xf32, #tpu.memory_space<vmem>>, vector<1x4x256xf32>
    %85 = vector.shape_cast %84 : vector<1x4x256xf32> to vector<4x256xf32>
    %86 = vector.shape_cast %83 : vector<4x256xf32> to vector<1x4x256xf32>
    tpu.vector_store %arg5[%c0_25, %c0_26, %c0_27], %86 {strides = array<i32>} : memref<1x4x256xf32, #tpu.memory_space<vmem>>, vector<1x4x256xf32>,
    return
  }
  func.func @transform_0(%arg0: i32, %arg1: i32) -> (i32, i32, i32) {
    %c0_i32 = arith.constant 0 : i32
    %c0_i32_0 = arith.constant 0 : i32
    %c0_i32_1 = arith.constant 0 : i32
    return %arg0, %c0_i32, %c0_i32_0 : i32, i32, i32
  }
  func.func @transform_1(%arg0: i32, %arg1: i32) -> (i32, i32, i32) {
    %c0_i32 = arith.constant 0 : i32
    %c0_i32_0 = arith.constant 0 : i32
    return %arg0, %c0_i32, %arg1 : i32, i32, i32
  }
  func.func @transform_2(%arg0: i32, %arg1: i32) -> (i32, i32) {
    %c0_i32 = arith.constant 0 : i32
    %c0_i32_0 = arith.constant 0 : i32
    return %c0_i32, %arg1 : i32, i32
  }
  func.func @transform_3(%arg0: i32, %arg1: i32) -> (i32, i32, i32) {
    %c0_i32 = arith.constant 0 : i32
    %c0_i32_0 = arith.constant 0 : i32
    return %arg0, %c0_i32, %arg1 : i32, i32, i32
  }
}

</mosaic_0001>

<llo_original>
// kernel: tpu_custom_call.1
$region0: #{tpu_custom_call.1}
  #allocation0 [shape = 'u32[]', space=smem, size = 0x4, offset = 0x4, fixed_abs, tag = 'smem constant byte address 0x4 - core index']
  #allocation1 [shape = 'u32[144,128]{1,0:T(1,128)}', space=vmem, size = 0x12000, scoped, tag = 'internal scratch']
  %s0 = inlined_call_operand.vmem [shape: f32[2,128,16], index: 0, kind: input, shape index: {}]
  %s1 = inlined_call_operand.vmem [shape: f32[2,2,512], index: 1, kind: input, shape index: {}]
  %s2 = inlined_call_operand.vmem [shape: f32[2,512], index: 2, kind: input, shape index: {}]
  %s3 = inlined_call_operand.hbm [shape: f32[2,4,512], index: 3, kind: output, shape index: {}]
  %s4 = sld [smem:[#allocation0]]
  $region45: #{tpu_custom_call.1} parent=0
    _
  %s6 = ssub.s32 1, %s4
  %s7 = scalar_select 0, %s6, %s4
  $region1: #{tpu_custom_call.1} parent=0
    #allocation2 [shape = 'u8[8192]{0}', space=vmem, size = 0x2000, scoped, tag = 'output window, operand 0']
    #allocation3 [shape = 's32[2]{0}', space=sflag, size = 0x8, scoped, tag = 'scoped memory for tpu_custom_call.1']
    %8 = vsyncpa [#allocation3], 0
    %s9 = scalar_lea.sflag [#allocation3], 1
    %10 = vsyncpa %s9, 0
    loop: start=0, step=1, limit=6
    $region2: #{tpu_custom_call.1} parent=1 // loop_pre_header
      _
    $region3: #{tpu_custom_call.1} parent=1 // loop_header
      %s12 = sphi 0, %s16
      %p13 = scmp.ge.s32.totalorder %s12, 6
      %s19 = sphi 0, %s31
      %s20 = sphi 0, %s27
      %s21 = sphi 0, %s19
      %s22 = sphi 0, %s20
      %s23 = sphi 0, %s21
      %s24 = sphi 0, %s22
      %s34 = sphi 0, %s36
      %s37 = sphi 0, %s34
      %s38 = sphi 0, %s37
      %s54 = sphi 0, %s38
      %s62 = sphi 0, %s64
      %s65 = sphi 0, %s62
      %s66 = sphi 0, %s65
      %s82 = sphi 0, %s66
      %s88 = sphi 0, %s90
      %s91 = sphi 0, %s88
      %s92 = sphi 0, %s91
      %s108 = sphi 0, %s92
      %s116 = sphi 0, %s118
      %s119 = sphi 0, %s116
      %s120 = sphi 0, %s119
      %s136 = sphi 0, %s120
    $region4: #{tpu_custom_call.1} parent=1 // loop_header_branch
      %15 = sbr.rel (%p13) target = $region8
    $region5: #{tpu_custom_call.1} parent=1 // loop_body
      %s17 = ssub.s32 %s12, 1
      %s18 = ssub.s32 %s12, 2
      %s25 = sadd.s32 1, %s20
      %p26 = scmp.ge.s32.totalorder %s25, 2
      %s27 = scalar_select %p26, 0, %s25
      %s28 = sadd.s32 1, %s19
      %s29 = scalar_select %p26, %s28, %s19
      %p30 = scmp.ge.s32.totalorder %s29, 2
      %s31 = scalar_select %p30, 0, %s29
      %s32 = ssub.s32 %s19, %s31
      %p33 = scmp.eq.s32.totalorder %s32, 0
      %s35 = sadd.s32 %s34, 1
      %s36 = scalar_select %p33, %s34, %s35
      %p39 = pneg %p33
      %p40 = scmp.eq.s32.totalorder %s12, 3
      %p41 = por %p39, %p40
      %p42 = scmp.ne.s32.totalorder %s34, %s37
      %p43 = scmp.eq.s32.totalorder %s12, 0
      %p44 = por %p42, %p43
      %p45 = scmp.ne.s32.totalorder %s34, %s37
      %p46 = scmp.eq.s32.totalorder %s17, 3
      %p47 = por %p45, %p46
      %p48 = scmp.ne.s32.totalorder %s37, %s38
      %p49 = scmp.eq.s32.totalorder %s17, 0
      %p50 = por %p48, %p49
      %p51 = scmp.ne.s32.totalorder %s37, %s38
      %p52 = scmp.eq.s32.totalorder %s18, 3
      %p53 = por %p51, %p52
      %p55 = scmp.ne.s32.totalorder %s38, %s54
      %p56 = scmp.eq.s32.totalorder %s18, 0
      %p57 = por %p55, %p56
      %s58 = ssub.s32 %s19, %s31
      %s59 = ssub.s32 %s20, %s27
      %s60 = sor.u32 %s58, %s59
      %p61 = scmp.eq.s32.totalorder %s60, 0
      %s63 = sadd.s32 %s62, 1
      %s64 = scalar_select %p61, %s62, %s63
      %p67 = pneg %p61
      %p68 = scmp.eq.s32.totalorder %s12, 3
      %p69 = por %p67, %p68
      %p70 = scmp.ne.s32.totalorder %s62, %s65
      %p71 = scmp.eq.s32.totalorder %s12, 0
      %p72 = por %p70, %p71
      %p73 = scmp.ne.s32.totalorder %s62, %s65
      %p74 = scmp.eq.s32.totalorder %s17, 3
      %p75 = por %p73, %p74
      %p76 = scmp.ne.s32.totalorder %s65, %s66
      %p77 = scmp.eq.s32.totalorder %s17, 0
      %p78 = por %p76, %p77
      %p79 = scmp.ne.s32.totalorder %s65, %s66
      %p80 = scmp.eq.s32.totalorder %s18, 3
      %p81 = por %p79, %p80
      %p83 = scmp.ne.s32.totalorder %s66, %s82
      %p84 = scmp.eq.s32.totalorder %s18, 0
      %p85 = por %p83, %p84
      %s86 = ssub.s32 %s20, %s27
      %p87 = scmp.eq.s32.totalorder %s86, 0
      %s89 = sadd.s32 %s88, 1
      %s90 = scalar_select %p87, %s88, %s89
      %p93 = pneg %p87
      %p94 = scmp.eq.s32.totalorder %s12, 3
      %p95 = por %p93, %p94
      %p96 = scmp.ne.s32.totalorder %s88, %s91
      %p97 = scmp.eq.s32.totalorder %s12, 0
      %p98 = por %p96, %p97
      %p99 = scmp.ne.s32.totalorder %s88, %s91
      %p100 = scmp.eq.s32.totalorder %s17, 3
      %p101 = por %p99, %p100
      %p102 = scmp.ne.s32.totalorder %s91, %s92
      %p103 = scmp.eq.s32.totalorder %s17, 0
      %p104 = por %p102, %p103
      %p105 = scmp.ne.s32.totalorder %s91, %s92
      %p106 = scmp.eq.s32.totalorder %s18, 3
      %p107 = por %p105, %p106
      %p109 = scmp.ne.s32.totalorder %s92, %s108
      %p110 = scmp.eq.s32.totalorder %s18, 0
      %p111 = por %p109, %p110
      %s112 = ssub.s32 %s19, %s31
      %s113 = ssub.s32 %s20, %s27
      %s114 = sor.u32 %s112, %s113
      %p115 = scmp.eq.s32.totalorder %s114, 0
      %s117 = sadd.s32 %s116, 1
      %s118 = scalar_select %p115, %s116, %s117
      %p121 = pneg %p115
      %p122 = scmp.eq.s32.totalorder %s12, 3
      %p123 = por %p121, %p122
      %p124 = scmp.ne.s32.totalorder %s116, %s119
      %p125 = scmp.eq.s32.totalorder %s12, 0
      %p126 = por %p124, %p125
      %p127 = scmp.ne.s32.totalorder %s116, %s119
      %p128 = scmp.eq.s32.totalorder %s17, 3
      %p129 = por %p127, %p128
      %p130 = scmp.ne.s32.totalorder %s119, %s120
      %p131 = scmp.eq.s32.totalorder %s17, 0
      %p132 = por %p130, %p131
      %p133 = scmp.ne.s32.totalorder %s119, %s120
      %p134 = scmp.eq.s32.totalorder %s18, 3
      %p135 = por %p133, %p134
      %p137 = scmp.ne.s32.totalorder %s120, %s136
      %p138 = scmp.eq.s32.totalorder %s18, 0
      %p139 = por %p137, %p138
      %p140 = scmp.le.s32.totalorder 1, %s12
      %p141 = scmp.lt.s32.totalorder %s12, 5
      %p142 = pnand %p140, %p141
      %p143 = pneg %p142
      // Predicated region
      $region9: #{tpu_custom_call.1} parent=5 // pred_check
        _
      $region10: #{tpu_custom_call.1} parent=5 // pred_check_branch
        %145 = sbr.rel (%p142) target = $region12
      $region11: #{tpu_custom_call.1} parent=5 // pred_region
        %s146 = ssub.s32 %s12, 1
      $region12: #{tpu_custom_call.1} parent=5 // pred_fallthru
        _
      %p147 = scmp.lt.s32.totalorder %s12, 4
      // Predicated region
      $region13: #{tpu_custom_call.1} parent=5 // pred_check
        %p148 = pneg %p147
      $region14: #{tpu_custom_call.1} parent=5 // pred_check_branch
        %150 = sbr.rel (%p148) target = $region16
      $region15: #{tpu_custom_call.1} parent=5 // pred_region
        // Predicated region
        $region17: #{tpu_custom_call.1} parent=15 // pred_check
          %p151 = pneg %p44
        $region18: #{tpu_custom_call.1} parent=15 // pred_check_branch
          %153 = sbr.rel (%p151) target = $region20
        $region19: #{tpu_custom_call.1} parent=15 // pred_region
          %p154 = scmp.lt.s32.totalorder %s19, 1
          %s155 = scalar_select %p154, %s19, 1
          %s156 = smul.addr %s155, 16
          %s157 = smul.addr %s156, 8
          %s158 = scalar_lea.vmem %s0, %s157
        $region20: #{tpu_custom_call.1} parent=15 // pred_fallthru
          _
        // Predicated region
        $region21: #{tpu_custom_call.1} parent=15 // pred_check
          %p159 = pneg %p72
        $region22: #{tpu_custom_call.1} parent=15 // pred_check_branch
          %161 = sbr.rel (%p159) target = $region24
        $region23: #{tpu_custom_call.1} parent=15 // pred_region
          %s162 = smul.u32 2, %s20
          %p163 = scmp.lt.s32.totalorder %s19, 1
          %s164 = scalar_select %p163, %s19, 1
          %p165 = scmp.lt.s32.totalorder %s162, 3
          %s166 = scalar_select %p165, %s162, 3
          %s167 = smul.addr %s164, 4
          %s168 = sadd.s32 %s166, %s167
          %s169 = smul.addr %s168, 2
          %s170 = scalar_lea.vmem %s1, %s169
          %s171 = smul.u32 2, %s20
        $region24: #{tpu_custom_call.1} parent=15 // pred_fallthru
          _
        // Predicated region
        $region25: #{tpu_custom_call.1} parent=15 // pred_check
          %p172 = pneg %p98
        $region26: #{tpu_custom_call.1} parent=15 // pred_check_branch
          %174 = sbr.rel (%p172) target = $region28
        $region27: #{tpu_custom_call.1} parent=15 // pred_region
          %s175 = smul.u32 2, %s20
          %p176 = scmp.lt.s32.totalorder %s175, 3
          %s177 = scalar_select %p176, %s175, 3
          %s178 = smul.addr %s177, 2
          %s179 = scalar_lea.vmem %s2, %s178
          %s180 = smul.u32 2, %s20
        $region28: #{tpu_custom_call.1} parent=15 // pred_fallthru
          _
      $region16: #{tpu_custom_call.1} parent=5 // pred_fallthru
        _
      %p181 = scmp.le.s32.totalorder 1, %s12
      %p182 = scmp.lt.s32.totalorder %s12, 5
      %p183 = pnand %p181, %p182
      %p184 = pneg %p183
      // Predicated region
      $region29: #{tpu_custom_call.1} parent=5 // pred_check
        _
      $region30: #{tpu_custom_call.1} parent=5 // pred_check_branch
        %186 = sbr.rel (%p183) target = $region32
      $region31: #{tpu_custom_call.1} parent=5 // pred_region
        %s187 = ssub.s32 %s12, 1
        %p188 = scmp.lt.s32.totalorder %s21, 1
        %s189 = scalar_select %p188, %s21, 1
        %s190 = smul.addr %s189, 16
        %s191 = smul.addr %s190, 8
        %s192 = scalar_lea.vmem %s0, %s191
        %p193 = pneg %p50
        %p194 = pneg %p47
        %s195 = smul.u32 2, %s22
        %p196 = scmp.lt.s32.totalorder %s21, 1
        %s197 = scalar_select %p196, %s21, 1
        %p198 = scmp.lt.s32.totalorder %s195, 3
        %s199 = scalar_select %p198, %s195, 3
        %s200 = smul.addr %s197, 4
        %s201 = sadd.s32 %s199, %s200
        %s202 = smul.addr %s201, 2
        %s203 = scalar_lea.vmem %s1, %s202
        %p204 = pneg %p78
        %p205 = pneg %p75
        %s206 = smul.u32 2, %s22
        %p207 = scmp.lt.s32.totalorder %s206, 3
        %s208 = scalar_select %p207, %s206, 3
        %s209 = smul.addr %s208, 2
        %s210 = scalar_lea.vmem %s2, %s209
        %p211 = pneg %p104
        %p212 = pneg %p101
        %p213 = pneg %p132
        %p214 = pneg %p129
        %s215 = sand.u32 %s119, 1
        %s216 = scalar_lea.sflag [#allocation3], %s215
        %s217 = sand.u32 %s119, 1
        %s218 = smul.addr %s217, 8
        %s219 = scalar_lea.vmem [#allocation2], %s218
        %p220 = scmp.lt.s32.totalorder %s21, 1
        %s221 = scalar_select %p220, %s21, 1
        %s222 = smul.addr %s221, 16
        %s223 = smul.addr %s222, 8
        %s224 = scalar_lea.vmem %s0, %s223
        %s225 = smul.u32 2, %s22
        %p226 = scmp.lt.s32.totalorder %s21, 1
        %s227 = scalar_select %p226, %s21, 1
        %p228 = scmp.lt.s32.totalorder %s225, 3
        %s229 = scalar_select %p228, %s225, 3
        %s230 = smul.addr %s227, 4
        %s231 = sadd.s32 %s229, %s230
        %s232 = smul.addr %s231, 2
        %s233 = scalar_lea.vmem %s1, %s232
        %s234 = smul.u32 2, %s22
        %s235 = smul.u32 2, %s22
        %p236 = scmp.lt.s32.totalorder %s235, 3
        %s237 = scalar_select %p236, %s235, 3
        %s238 = smul.addr %s237, 2
        %s239 = scalar_lea.vmem %s2, %s238
        %s240 = smul.u32 2, %s22
        %s241 = smul.u32 2, %s22
        %v242 = vld [vmem:[%s239] sm:$0xf]
        %v243 = vld [vmem:[%s233] sm:$0xf]
        %v244 = vadd.f32 %v242, %v243
        %v245 = vmax.f32 %v244, 0.0
        %v246 = vmin.f32 %v245, 31.0
        %v247 = vmin.f32 %v245, 15.0
        %v248 = vfloor.f32 %v246
        %v249 = vfloor.f32 %v247
        %v250 = vadd.f32 %v248, 1.0
        %v251 = vadd.f32 %v249, 1.0
        %v252 = vcvt.f32.s32.to.zero.pseudo %v248
        %v253 = vcvt.f32.s32.to.zero.pseudo %v249
        %v254 = vmax.f32 %v250, 0.0
        %v255 = vmin.f32 %v254, 31.0
        %v256 = vcvt.f32.s32.to.zero.pseudo %v255
        %v257 = vmax.f32 %v251, 0.0
        %v258 = vmin.f32 %v257, 15.0
        %v259 = vcvt.f32.s32.to.zero.pseudo %v258
        %v260 = vsub.f32 %v250, %v246
        %v261 = vsub.f32 %v246, %v248
        %v262 = vsub.f32 %v251, %v247
        %v263 = vsub.f32 %v247, %v249
        %v264 = vlaneseq
        %v265 = vshrl.u32 %v264, 7
        %v266 = vadd.s32 %v265, 8
        %v267 = vlaneseq
        %v268 = vshrl.u32 %v267, 7
        %v269 = vsub.s32 1, %v268
        %v270 = vrot.slane %v253, %v269
        %v271 = vlaneseq
        %v272 = vshrl.u32 %v271, 7
        %v273 = vsub.s32 3, %v272
        %v274 = vrot.slane %v253, %v273
        %v275 = vlaneseq
        %v276 = vshrl.u32 %v275, 7
        %v277 = vsub.s32 1, %v276
        %v278 = vrot.slane %v270, %v277
        %v279 = vlaneseq
        %v280 = vshrl.u32 %v279, 7
        %v281 = vsub.s32 1, %v280
        %v282 = vrot.slane %v274, %v281
        %vm283 = vcmp.eq.s32.totalorder %v265, %v278
        %vm284 = vcmp.eq.s32.totalorder %v265, %v282
        %vm285 = vcmp.eq.s32.totalorder %v266, %v278
        %vm286 = vcmp.eq.s32.totalorder %v266, %v282
        %v288 = vlaneseq
        %v289 = vshrl.u32 %v288, 7
        %v290 = vsub.s32 1, %v289
        %v291 = vrot.slane %v262, %v290
        %v292 = vlaneseq
        %v293 = vshrl.u32 %v292, 7
        %v294 = vsub.s32 3, %v293
        %v295 = vrot.slane %v262, %v294
        %v298 = vlaneseq
        %v299 = vshrl.u32 %v298, 7
        %v300 = vsub.s32 1, %v299
        %v301 = vrot.slane %v291, %v300
        %v302 = vlaneseq
        %v303 = vshrl.u32 %v302, 7
        %v304 = vsub.s32 1, %v303
        %v305 = vrot.slane %v295, %v304
        %v306 = vsel %vm283, %v301, 0.0
        %v307 = vsel %vm284, %v305, 0.0
        %v308 = vsel %vm285, %v301, 0.0
        %v309 = vsel %vm286, %v305, 0.0
        %v310 = vlaneseq
        %v311 = vshrl.u32 %v310, 7
        %v312 = vsub.s32 1, %v311
        %v313 = vrot.slane %v259, %v312
        %v314 = vlaneseq
        %v315 = vshrl.u32 %v314, 7
        %v316 = vsub.s32 3, %v315
        %v317 = vrot.slane %v259, %v316
        %v318 = vlaneseq
        %v319 = vshrl.u32 %v318, 7
        %v320 = vsub.s32 1, %v319
        %v321 = vrot.slane %v313, %v320
        %v322 = vlaneseq
        %v323 = vshrl.u32 %v322, 7
        %v324 = vsub.s32 1, %v323
        %v325 = vrot.slane %v317, %v324
        %vm326 = vcmp.eq.s32.totalorder %v265, %v321
        %vm327 = vcmp.eq.s32.totalorder %v265, %v325
        %vm328 = vcmp.eq.s32.totalorder %v266, %v321
        %vm329 = vcmp.eq.s32.totalorder %v266, %v325
        %v331 = vlaneseq
        %v332 = vshrl.u32 %v331, 7
        %v333 = vsub.s32 1, %v332
        %v334 = vrot.slane %v263, %v333
        %v335 = vlaneseq
        %v336 = vshrl.u32 %v335, 7
        %v337 = vsub.s32 3, %v336
        %v338 = vrot.slane %v263, %v337
        %v341 = vlaneseq
        %v342 = vshrl.u32 %v341, 7
        %v343 = vsub.s32 1, %v342
        %v344 = vrot.slane %v334, %v343
        %v345 = vlaneseq
        %v346 = vshrl.u32 %v345, 7
        %v347 = vsub.s32 1, %v346
        %v348 = vrot.slane %v338, %v347
        %v349 = vsel %vm326, %v344, 0.0
        %v350 = vsel %vm327, %v348, 0.0
        %v351 = vsel %vm328, %v344, 0.0
        %v352 = vsel %vm329, %v348, 0.0
        %v353 = vadd.f32 %v306, %v349
        %v354 = vadd.f32 %v307, %v350
        %v355 = vadd.f32 %v308, %v351
        %v356 = vadd.f32 %v309, %v352
        %v357 = vadd.s32 %v265, 16
        %v358 = vadd.s32 %v265, 24
        %v359 = vlaneseq
        %v360 = vshrl.u32 %v359, 7
        %v361 = vsub.s32 0, %v360
        %v362 = vrot.slane %v252, %v361
        %v363 = vlaneseq
        %v364 = vshrl.u32 %v363, 7
        %v365 = vsub.s32 2, %v364
        %v366 = vrot.slane %v252, %v365
        %v367 = vlaneseq
        %v368 = vshrl.u32 %v367, 7
        %v369 = vsub.s32 0, %v368
        %v370 = vrot.slane %v362, %v369
        %v371 = vlaneseq
        %v372 = vshrl.u32 %v371, 7
        %v373 = vsub.s32 0, %v372
        %v374 = vrot.slane %v366, %v373
        %vm375 = vcmp.eq.s32.totalorder %v265, %v370
        %vm376 = vcmp.eq.s32.totalorder %v265, %v374
        %vm377 = vcmp.eq.s32.totalorder %v266, %v370
        %vm378 = vcmp.eq.s32.totalorder %v266, %v374
        %vm379 = vcmp.eq.s32.totalorder %v357, %v370
        %vm380 = vcmp.eq.s32.totalorder %v357, %v374
        %vm381 = vcmp.eq.s32.totalorder %v358, %v370
        %vm382 = vcmp.eq.s32.totalorder %v358, %v374
        %v384 = vlaneseq
        %v385 = vshrl.u32 %v384, 7
        %v386 = vsub.s32 0, %v385
        %v387 = vrot.slane %v260, %v386
        %v388 = vlaneseq
        %v389 = vshrl.u32 %v388, 7
        %v390 = vsub.s32 2, %v389
        %v391 = vrot.slane %v260, %v390
        %v394 = vlaneseq
        %v395 = vshrl.u32 %v394, 7
        %v396 = vsub.s32 0, %v395
        %v397 = vrot.slane %v387, %v396
        %v398 = vlaneseq
        %v399 = vshrl.u32 %v398, 7
        %v400 = vsub.s32 0, %v399
        %v401 = vrot.slane %v391, %v400
        %v402 = vsel %vm375, %v397, 0.0
        %v403 = vsel %vm376, %v401, 0.0
        %v404 = vsel %vm377, %v397, 0.0
        %v405 = vsel %vm378, %v401, 0.0
        %v406 = vsel %vm379, %v397, 0.0
        %v407 = vsel %vm380, %v401, 0.0
        %v408 = vsel %vm381, %v397, 0.0
        %v409 = vsel %vm382, %v401, 0.0
        %v410 = vlaneseq
        %v411 = vshrl.u32 %v410, 7
        %v412 = vsub.s32 0, %v411
        %v413 = vrot.slane %v256, %v412
        %v414 = vlaneseq
        %v415 = vshrl.u32 %v414, 7
        %v416 = vsub.s32 2, %v415
        %v417 = vrot.slane %v256, %v416
        %v418 = vlaneseq
        %v419 = vshrl.u32 %v418, 7
        %v420 = vsub.s32 0, %v419
        %v421 = vrot.slane %v413, %v420
        %v422 = vlaneseq
        %v423 = vshrl.u32 %v422, 7
        %v424 = vsub.s32 0, %v423
        %v425 = vrot.slane %v417, %v424
        %vm426 = vcmp.eq.s32.totalorder %v265, %v421
        %vm427 = vcmp.eq.s32.totalorder %v265, %v425
        %vm428 = vcmp.eq.s32.totalorder %v266, %v421
        %vm429 = vcmp.eq.s32.totalorder %v266, %v425
        %vm430 = vcmp.eq.s32.totalorder %v357, %v421
        %vm431 = vcmp.eq.s32.totalorder %v357, %v425
        %vm432 = vcmp.eq.s32.totalorder %v358, %v421
        %vm433 = vcmp.eq.s32.totalorder %v358, %v425
        %v435 = vlaneseq
        %v436 = vshrl.u32 %v435, 7
        %v437 = vsub.s32 0, %v436
        %v438 = vrot.slane %v261, %v437
        %v439 = vlaneseq
        %v440 = vshrl.u32 %v439, 7
        %v441 = vsub.s32 2, %v440
        %v442 = vrot.slane %v261, %v441
        %v445 = vlaneseq
        %v446 = vshrl.u32 %v445, 7
        %v447 = vsub.s32 0, %v446
        %v448 = vrot.slane %v438, %v447
        %v449 = vlaneseq
        %v450 = vshrl.u32 %v449, 7
        %v451 = vsub.s32 0, %v450
        %v452 = vrot.slane %v442, %v451
        %v453 = vsel %vm426, %v448, 0.0
        %v454 = vsel %vm427, %v452, 0.0
        %v455 = vsel %vm428, %v448, 0.0
        %v456 = vsel %vm429, %v452, 0.0
        %v457 = vsel %vm430, %v448, 0.0
        %v458 = vsel %vm431, %v452, 0.0
        %v459 = vsel %vm432, %v448, 0.0
        %v460 = vsel %vm433, %v452, 0.0
        %v461 = vadd.f32 %v402, %v453
        %v462 = vadd.f32 %v403, %v454
        %v463 = vadd.f32 %v404, %v455
        %v464 = vadd.f32 %v405, %v456
        %v465 = vadd.f32 %v406, %v457
        %v466 = vadd.f32 %v407, %v458
        %v467 = vadd.f32 %v408, %v459
        %v468 = vadd.f32 %v409, %v460
        %v469 = vld [vmem:[%s224] sm:$0xff]
        %v470 = vld [vmem:[%s224 + $0x8] sm:$0xff]
        %v471 = vld [vmem:[%s224 + $0x10] sm:$0xff]
        %v472 = vld [vmem:[%s224 + $0x18] sm:$0xff]
        %v473 = vld [vmem:[%s224 + $0x20] sm:$0xff]
        %v474 = vld [vmem:[%s224 + $0x28] sm:$0xff]
        %v475 = vld [vmem:[%s224 + $0x30] sm:$0xff]
        %v476 = vld [vmem:[%s224 + $0x38] sm:$0xff]
        %v477 = vld [vmem:[%s224 + $0x40] sm:$0xff]
        %v478 = vld [vmem:[%s224 + $0x48] sm:$0xff]
        %v479 = vld [vmem:[%s224 + $0x50] sm:$0xff]
        %v480 = vld [vmem:[%s224 + $0x58] sm:$0xff]
        %v481 = vld [vmem:[%s224 + $0x60] sm:$0xff]
        %v482 = vld [vmem:[%s224 + $0x68] sm:$0xff]
        %v483 = vld [vmem:[%s224 + $0x70] sm:$0xff]
        %v484 = vld [vmem:[%s224 + $0x78] sm:$0xff]
        %vm485 = vcmask 130048
        %v487 = vsel %vm485, %v469, 0
        %v490 = vsel %vm485, %v470, 0
        %v493 = vsel %vm485, %v471, 0
        %v496 = vsel %vm485, %v472, 0
        %v499 = vsel %vm485, %v473, 0
        %v502 = vsel %vm485, %v474, 0
        %v505 = vsel %vm485, %v475, 0
        %v508 = vsel %vm485, %v476, 0
        %v511 = vsel %vm485, %v477, 0
        %v514 = vsel %vm485, %v478, 0
        %v517 = vsel %vm485, %v479, 0
        %v520 = vsel %vm485, %v480, 0
        %v523 = vsel %vm485, %v481, 0
        %v526 = vsel %vm485, %v482, 0
        %v529 = vsel %vm485, %v483, 0
        %v532 = vsel %vm485, %v484, 0
        %534 = vmatprep.subr.mxu0 0.0
        %535 = vmatpush1.msra.mxu0 0.0
        %536 = vmatprep.subr.mxu0 0.0
        %537 = vmatpush1.msra.mxu0 0.0
        %538 = vmatprep.subr.mxu0 0.0
        %539 = vmatpush1.msra.mxu0 0.0
        %540 = vmatprep.subr.mxu0 0.0
        %541 = vmatpush1.msra.mxu0 0.0
        %542 = vmatprep.subr.mxu0 0.0
        %543 = vmatpush1.msra.mxu0 0.0
        %544 = vmatprep.subr.mxu0 0.0
        %545 = vmatpush1.msra.mxu0 0.0
        %546 = vmatprep.subr.mxu0 0.0
        %547 = vmatpush1.msra.mxu0 0.0
        %548 = vmatprep.subr.mxu0 0.0
        %549 = vmatpush1.msra.mxu0 0.0
        %550 = vmatprep.subr.mxu0 0.0
        %551 = vmatpush1.msra.mxu0 0.0
        %552 = vmatprep.subr.mxu0 0.0
        %553 = vmatpush1.msra.mxu0 0.0
        %554 = vmatprep.subr.mxu0 0.0
        %555 = vmatpush1.msra.mxu0 0.0
        %556 = vmatprep.subr.mxu0 0.0
        %557 = vmatpush1.msra.mxu0 0.0
        %558 = vmatprep.subr.mxu0 0.0
        %559 = vmatpush1.msra.mxu0 0.0
        %560 = vmatprep.subr.mxu0 0.0
        %561 = vmatpush1.msra.mxu0 0.0
        %562 = vmatprep.subr.mxu0 %v356
        %563 = vmatpush1.msra.mxu0 %v355
        %564 = vmatprep.subr.mxu0 %v354
        %565 = vmatpush1.msra.mxu0 %v353
        %566 = vmatprep.subr.mxu0 0.0
        %567 = vmatpush2.msra.mxu0 0.0
        %568 = vmatprep.subr.mxu0 0.0
        %569 = vmatpush2.msra.mxu0 0.0
        %570 = vmatprep.subr.mxu0 0.0
        %571 = vmatpush2.msra.mxu0 0.0
        %572 = vmatprep.subr.mxu0 0.0
        %573 = vmatpush2.msra.mxu0 0.0
        %574 = vmatprep.subr.mxu0 0.0
        %575 = vmatpush2.msra.mxu0 0.0
        %576 = vmatprep.subr.mxu0 0.0
        %577 = vmatpush2.msra.mxu0 0.0
        %578 = vmatprep.subr.mxu0 0.0
        %579 = vmatpush2.msra.mxu0 0.0
        %580 = vmatprep.subr.mxu0 0.0
        %581 = vmatpush2.msra.mxu0 0.0
        %582 = vmatprep.subr.mxu0 0.0
        %583 = vmatpush2.msra.mxu0 0.0
        %584 = vmatprep.subr.mxu0 0.0
        %585 = vmatpush2.msra.mxu0 0.0
        %586 = vmatprep.subr.mxu0 0.0
        %587 = vmatpush2.msra.mxu0 0.0
        %588 = vmatprep.subr.mxu0 0.0
        %589 = vmatpush2.msra.mxu0 0.0
        %590 = vmatprep.subr.mxu0 0.0
        %591 = vmatpush2.msra.mxu0 0.0
        %592 = vmatprep.subr.mxu0 0.0
        %593 = vmatpush2.msra.mxu0 0.0
        %594 = vmatprep.subr.mxu0 0.0
        %595 = vmatpush2.msra.mxu0 0.0
        %596 = vmatprep.subr.mxu0 0.0
        %597 = vmatpush2.msra.mxu0 0.0
        %598 = vmatprep.mubr.f32.mxu0 0.0
        %599 = vmatmul.mubr.f32.gmra.mxu0 %v487
        %v600 = vpop.f32.mrf.mxu0
        %v601 = vadd.f32 0.0, %v600
        %v602 = vpop.f32.mrf.mxu0
        %v603 = vadd.f32 0.0, %v602
        %604 = vmatprep.mubr.f32.mxu0 0.0
        %605 = vmatmul.mubr.f32.gmra.mxu0 %v490
        %v606 = vpop.f32.mrf.mxu0
        %v607 = vadd.f32 0.0, %v606
        %v608 = vpop.f32.mrf.mxu0
        %v609 = vadd.f32 0.0, %v608
        %610 = vmatprep.mubr.f32.mxu0 0.0
        %611 = vmatmul.mubr.f32.gmra.mxu0 %v493
        %v612 = vpop.f32.mrf.mxu0
        %v613 = vadd.f32 0.0, %v612
        %v614 = vpop.f32.mrf.mxu0
        %v615 = vadd.f32 0.0, %v614
        %616 = vmatprep.mubr.f32.mxu0 0.0
        %617 = vmatmul.mubr.f32.gmra.mxu0 %v496
        %v618 = vpop.f32.mrf.mxu0
        %v619 = vadd.f32 0.0, %v618
        %v620 = vpop.f32.mrf.mxu0
        %v621 = vadd.f32 0.0, %v620
        %622 = vmatprep.mubr.f32.mxu0 0.0
        %623 = vmatmul.mubr.f32.gmra.mxu0 %v499
        %v624 = vpop.f32.mrf.mxu0
        %v625 = vadd.f32 0.0, %v624
        %v626 = vpop.f32.mrf.mxu0
        %v627 = vadd.f32 0.0, %v626
        %628 = vmatprep.mubr.f32.mxu0 0.0
        %629 = vmatmul.mubr.f32.gmra.mxu0 %v502
        %v630 = vpop.f32.mrf.mxu0
        %v631 = vadd.f32 0.0, %v630
        %v632 = vpop.f32.mrf.mxu0
        %v633 = vadd.f32 0.0, %v632
        %634 = vmatprep.mubr.f32.mxu0 0.0
        %635 = vmatmul.mubr.f32.gmra.mxu0 %v505
        %v636 = vpop.f32.mrf.mxu0
        %v637 = vadd.f32 0.0, %v636
        %v638 = vpop.f32.mrf.mxu0
        %v639 = vadd.f32 0.0, %v638
        %640 = vmatprep.mubr.f32.mxu0 0.0
        %641 = vmatmul.mubr.f32.gmra.mxu0 %v508
        %v642 = vpop.f32.mrf.mxu0
        %v643 = vadd.f32 0.0, %v642
        %v644 = vpop.f32.mrf.mxu0
        %v645 = vadd.f32 0.0, %v644
        %646 = vmatprep.mubr.f32.mxu0 0.0
        %647 = vmatmul.mubr.f32.gmra.mxu0 %v511
        %v648 = vpop.f32.mrf.mxu0
        %v649 = vadd.f32 0.0, %v648
        %v650 = vpop.f32.mrf.mxu0
        %v651 = vadd.f32 0.0, %v650
        %652 = vmatprep.mubr.f32.mxu0 0.0
        %653 = vmatmul.mubr.f32.gmra.mxu0 %v514
        %v654 = vpop.f32.mrf.mxu0
        %v655 = vadd.f32 0.0, %v654
        %v656 = vpop.f32.mrf.mxu0
        %v657 = vadd.f32 0.0, %v656
        %658 = vmatprep.mubr.f32.mxu0 0.0
        %659 = vmatmul.mubr.f32.gmra.mxu0 %v517
        %v660 = vpop.f32.mrf.mxu0
        %v661 = vadd.f32 0.0, %v660
        %v662 = vpop.f32.mrf.mxu0
        %v663 = vadd.f32 0.0, %v662
        %664 = vmatprep.mubr.f32.mxu0 0.0
        %665 = vmatmul.mubr.f32.gmra.mxu0 %v520
        %v666 = vpop.f32.mrf.mxu0
        %v667 = vadd.f32 0.0, %v666
        %v668 = vpop.f32.mrf.mxu0
        %v669 = vadd.f32 0.0, %v668
        %670 = vmatprep.mubr.f32.mxu0 0.0
        %671 = vmatmul.mubr.f32.gmra.mxu0 %v523
        %v672 = vpop.f32.mrf.mxu0
        %v673 = vadd.f32 0.0, %v672
        %v674 = vpop.f32.mrf.mxu0
        %v675 = vadd.f32 0.0, %v674
        %676 = vmatprep.mubr.f32.mxu0 0.0
        %677 = vmatmul.mubr.f32.gmra.mxu0 %v526
        %v678 = vpop.f32.mrf.mxu0
        %v679 = vadd.f32 0.0, %v678
        %v680 = vpop.f32.mrf.mxu0
        %v681 = vadd.f32 0.0, %v680
        %682 = vmatprep.mubr.f32.mxu0 0.0
        %683 = vmatmul.mubr.f32.gmra.mxu0 %v529
        %v684 = vpop.f32.mrf.mxu0
        %v685 = vadd.f32 0.0, %v684
        %v686 = vpop.f32.mrf.mxu0
        %v687 = vadd.f32 0.0, %v686
        %688 = vmatprep.mubr.f32.mxu0 0.0
        %689 = vmatmul.mubr.f32.gmra.mxu0 %v532
        %v690 = vpop.f32.mrf.mxu0
        %v691 = vadd.f32 0.0, %v690
        %v692 = vpop.f32.mrf.mxu0
        %v693 = vadd.f32 0.0, %v692
        %694 = vdwg.mxu0
        %v695 = vmul.f32 %v601, %v461
        %v696 = vmul.f32 %v603, %v462
        %v697 = vmul.f32 %v607, %v463
        %v698 = vmul.f32 %v609, %v464
        %v699 = vmul.f32 %v613, %v465
        %v700 = vmul.f32 %v615, %v466
        %v701 = vmul.f32 %v619, %v467
        %v702 = vmul.f32 %v621, %v468
        %v703 = vadd.f32 %v695, %v697
        %v704 = vadd.f32 %v703, %v699
        %v705 = vadd.f32 %v704, %v701
        %v706 = vrot.slane %v705, 4
        %v707 = vadd.f32 %v705, %v706
        %v708 = vrot.slane %v707, 2
        %v709 = vadd.f32 %v707, %v708
        %v710 = vrot.slane %v709, 1
        %v711 = vadd.f32 %v709, %v710
        %v712 = vadd.f32 %v696, %v698
        %v713 = vadd.f32 %v712, %v700
        %v714 = vadd.f32 %v713, %v702
        %v715 = vrot.slane %v714, 4
        %v716 = vadd.f32 %v714, %v715
        %v717 = vrot.slane %v716, 2
        %v718 = vadd.f32 %v716, %v717
        %v719 = vrot.slane %v718, 1
        %v720 = vadd.f32 %v718, %v719
        %v721 = vmul.f32 %v625, %v461
        %v722 = vmul.f32 %v627, %v462
        %v723 = vmul.f32 %v631, %v463
        %v724 = vmul.f32 %v633, %v464
        %v725 = vmul.f32 %v637, %v465
        %v726 = vmul.f32 %v639, %v466
        %v727 = vmul.f32 %v643, %v467
        %v728 = vmul.f32 %v645, %v468
        %v729 = vadd.f32 %v721, %v723
        %v730 = vadd.f32 %v729, %v725
        %v731 = vadd.f32 %v730, %v727
        %v732 = vrot.slane %v731, 4
        %v733 = vadd.f32 %v731, %v732
        %v734 = vrot.slane %v733, 2
        %v735 = vadd.f32 %v733, %v734
        %v736 = vrot.slane %v735, 1
        %v737 = vadd.f32 %v735, %v736
        %v738 = vadd.f32 %v722, %v724
        %v739 = vadd.f32 %v738, %v726
        %v740 = vadd.f32 %v739, %v728
        %v741 = vrot.slane %v740, 4
        %v742 = vadd.f32 %v740, %v741
        %v743 = vrot.slane %v742, 2
        %v744 = vadd.f32 %v742, %v743
        %v745 = vrot.slane %v744, 1
        %v746 = vadd.f32 %v744, %v745
        %v747 = vmul.f32 %v649, %v461
        %v748 = vmul.f32 %v651, %v462
        %v749 = vmul.f32 %v655, %v463
        %v750 = vmul.f32 %v657, %v464
        %v751 = vmul.f32 %v661, %v465
        %v752 = vmul.f32 %v663, %v466
        %v753 = vmul.f32 %v667, %v467
        %v754 = vmul.f32 %v669, %v468
        %v755 = vadd.f32 %v747, %v749
        %v756 = vadd.f32 %v755, %v751
        %v757 = vadd.f32 %v756, %v753
        %v758 = vrot.slane %v757, 4
        %v759 = vadd.f32 %v757, %v758
        %v760 = vrot.slane %v759, 2
        %v761 = vadd.f32 %v759, %v760
        %v762 = vrot.slane %v761, 1
        %v763 = vadd.f32 %v761, %v762
        %v764 = vadd.f32 %v748, %v750
        %v765 = vadd.f32 %v764, %v752
        %v766 = vadd.f32 %v765, %v754
        %v767 = vrot.slane %v766, 4
        %v768 = vadd.f32 %v766, %v767
        %v769 = vrot.slane %v768, 2
        %v770 = vadd.f32 %v768, %v769
        %v771 = vrot.slane %v770, 1
        %v772 = vadd.f32 %v770, %v771
        %v773 = vmul.f32 %v673, %v461
        %v774 = vmul.f32 %v675, %v462
        %v775 = vmul.f32 %v679, %v463
        %v776 = vmul.f32 %v681, %v464
        %v777 = vmul.f32 %v685, %v465
        %v778 = vmul.f32 %v687, %v466
        %v779 = vmul.f32 %v691, %v467
        %v780 = vmul.f32 %v693, %v468
        %v781 = vadd.f32 %v773, %v775
        %v782 = vadd.f32 %v781, %v777
        %v783 = vadd.f32 %v782, %v779
        %v784 = vrot.slane %v783, 4
        %v785 = vadd.f32 %v783, %v784
        %v786 = vrot.slane %v785, 2
        %v787 = vadd.f32 %v785, %v786
        %v788 = vrot.slane %v787, 1
        %v789 = vadd.f32 %v787, %v788
        %v790 = vadd.f32 %v774, %v776
        %v791 = vadd.f32 %v790, %v778
        %v792 = vadd.f32 %v791, %v780
        %v793 = vrot.slane %v792, 4
        %v794 = vadd.f32 %v792, %v793
        %v795 = vrot.slane %v794, 2
        %v796 = vadd.f32 %v794, %v795
        %v797 = vrot.slane %v796, 1
        %v798 = vadd.f32 %v796, %v797
        %vm799 = vcmask 1040384
        %v800 = vsel %vm799, %v711, %v737
        %v801 = vsel %vm799, %v720, %v746
        %vm802 = vcmask 1041408
        %v803 = vsel %vm802, %v800, %v763
        %v804 = vsel %vm802, %v801, %v772
        %vm805 = vcmask 1042432
        %v806 = vsel %vm805, %v803, %v789
        %v807 = vsel %vm805, %v804, %v798
        %v810 = vcombine.low %v806, %v807
        %812 = vst [vmem:[%s219] sm:$0xff] %v810
        %s813 = sand.u32 %s119, 1
        %s814 = scalar_lea.sflag [#allocation3], %s813
        %s815 = sand.u32 %s119, 1
        %s816 = smul.addr %s815, 8
        %s817 = scalar_lea.vmem [#allocation2], %s816
        // Predicated region
        $region33: #{tpu_custom_call.1} parent=31 // pred_check
          %p818 = pneg %p129
        $region34: #{tpu_custom_call.1} parent=31 // pred_check_branch
          %820 = sbr.rel (%p818) target = $region36
        $region35: #{tpu_custom_call.1} parent=31 // pred_region
          %s821 = smul.u32 2, %s22
          %s823 = ssub.s32 128, 128
          %824 = vsyncadd %s814, %s823
          %s825 = smul.addr %s21, 4
          %s826 = sadd.s32 %s821, %s825
          %s827 = smul.addr %s826, 64
          %s828 = scalar_lea.hbm %s3, %s827
          %s830 = sshll.u32 %s817, 4
          %s831 = int_to_ptr.vmem [resolvable:$true] %s830
          %833 = dma.vmem_to_hbm [thread:$0]  %s831, 128, %s828, %s814
        $region36: #{tpu_custom_call.1} parent=31 // pred_fallthru
          _
      $region32: #{tpu_custom_call.1} parent=5 // pred_fallthru
        _
      %p834 = scmp.le.s32.totalorder 2, %s12
      // Predicated region
      $region37: #{tpu_custom_call.1} parent=5 // pred_check
        %p835 = pneg %p834
      $region38: #{tpu_custom_call.1} parent=5 // pred_check_branch
        %837 = sbr.rel (%p835) target = $region40
      $region39: #{tpu_custom_call.1} parent=5 // pred_region
        %s838 = ssub.s32 %s12, 2
        // Predicated region
        $region41: #{tpu_custom_call.1} parent=39 // pred_check
          %p839 = pneg %p135
        $region42: #{tpu_custom_call.1} parent=39 // pred_check_branch
          %841 = sbr.rel (%p839) target = $region44
        $region43: #{tpu_custom_call.1} parent=39 // pred_region
          %s842 = sand.u32 %s120, 1
          %s843 = scalar_lea.sflag [#allocation3], %s842
          %s844 = sand.u32 %s120, 1
          %s845 = smul.addr %s844, 8
          %s846 = scalar_lea.vmem [#allocation2], %s845
          %847 = dma.done %s843, 128
        $region44: #{tpu_custom_call.1} parent=39 // pred_fallthru
          _
      $region40: #{tpu_custom_call.1} parent=5 // pred_fallthru
        _
    $region6: #{tpu_custom_call.1} parent=1 // loop_footer
      %s16 = sadd.s32 1, %s12
    $region7: #{tpu_custom_call.1} parent=1 // loop_footer_branch
      %11 = sbr.rel target = $region3
    $region8: #{tpu_custom_call.1} parent=1 // loop_exit
      _
    %848 = vsyncpa [#allocation3], 1
    %s849 = scalar_lea.sflag [#allocation3], 1
    %850 = vsyncpa %s849, 1

</llo_original>
